<compile_context>
chip_gen: v7x
topology: tpu7x:2x2x1
jax: 0.10.0
libtpu: 0.0.40
codegen_flags: <defaults>
</compile_context>

<pallas_src>
import functools
import math

import jax
import jax.numpy as jnp
from jax.experimental import pallas as pl
from jax.experimental.pallas import tpu as pltpu

_NEG_BIG = -1e30                        # finite "-inf": no inf-inf -> NaN risk
_VMEM_LIMIT_BYTES = 48 * 1024 * 1024    # < v7x 64 MiB physical; ample headroom


def _round_up(x, m):
    return ((x + m - 1) // m) * m


def _single_pass_kernel(q_ref, kv_ref, o_ref, *, scale, lk_valid, mask_k,
                        compute_dtype):
    """Whole (padded) KV resident in VMEM: plain softmax, no carried state.

    q_ref  : (1, TQ, D)  query tile
    kv_ref : (1, LK, D)  entire (padded) key/value tensor for this batch elem
    o_ref  : (1, TQ, D)  output tile
    """
    q = (q_ref[0].astype(jnp.float32) * scale).astype(compute_dtype)
    kv = kv_ref[0].astype(compute_dtype)

    s = jax.lax.dot_general(q, kv, (((1,), (1,)), ((), ())),
                            preferred_element_type=jnp.float32)
    if mask_k:  # static: only emitted when Lk was padded up to a tile multiple
        col = jax.lax.broadcasted_iota(jnp.int32, s.shape, 1)
        s = jnp.where(col < lk_valid, s, _NEG_BIG)

    m = jnp.max(s, axis=-1, keepdims=True)
    p = jnp.exp(s - m)
    l = jnp.sum(p, axis=-1, keepdims=True)
    acc = jax.lax.dot_general(p.astype(compute_dtype), kv,
                              (((1,), (0,)), ((), ())),
                              preferred_element_type=jnp.float32)
    o_ref[0] = (acc / l).astype(o_ref.dtype)


def _flash_kernel(q_ref, kv_ref, o_ref, qs_ref, m_ref, l_ref, acc_ref,
                  *, scale, lk_valid, block_k, mask_k, compute_dtype):
    """One (q-tile, kv-tile) step of online-softmax cross attention.

    q_ref  : (1, TQ, D)  query tile (resident across the kv axis)
    kv_ref : (1, TK, D)  shared key/value tile (one DMA, used by both matmuls)
    o_ref  : (1, TQ, D)  output tile (written on the last kv step only)
    qs_ref : (TQ, D)     pre-scaled Q in MXU operand dtype (hoisted, scratch)
    m_ref  : (TQ, 1)     running row max        (f32 scratch)
    l_ref  : (TQ, 1)     running softmax denom  (f32 scratch)
    acc_ref: (TQ, D)     running weighted sum   (f32 scratch)
    """
    k_idx = pl.program_id(2)

    @pl.when(k_idx == 0)
    def _init():
        # Q tile is resident across the whole k axis: scale + cast it once.
        qs_ref[...] = (q_ref[0].astype(jnp.float32) * scale).astype(compute_dtype)
        m_ref[...] = jnp.full(m_ref.shape, _NEG_BIG, dtype=m_ref.dtype)
        l_ref[...] = jnp.zeros(l_ref.shape, dtype=l_ref.dtype)
        acc_ref[...] = jnp.zeros(acc_ref.shape, dtype=acc_ref.dtype)

    kv = kv_ref[0].astype(compute_dtype)

    # Score tile: (TQ, TK), bf16 operands, f32 accumulation on the MXU.
    s = jax.lax.dot_general(qs_ref[...], kv, (((1,), (1,)), ((), ())),
                            preferred_element_type=jnp.float32)
    if mask_k:  # static: only emitted when Lk was padded up to a tile multiple
        col = k_idx * block_k + jax.lax.broadcasted_iota(jnp.int32, s.shape, 1)
        s = jnp.where(col < lk_valid, s, _NEG_BIG)

    m_prev = m_ref[...]
    m_new = jnp.maximum(m_prev, jnp.max(s, axis=-1, keepdims=True))
    alpha = jnp.exp(m_prev - m_new)          # rescale factor for old partials
    p = jnp.exp(s - m_new)                   # un-normalized probabilities

    l_ref[...] = alpha * l_ref[...] + jnp.sum(p, axis=-1, keepdims=True)
    acc_ref[...] = alpha * acc_ref[...] + jax.lax.dot_general(
        p.astype(compute_dtype), kv, (((1,), (0,)), ((), ())),
        preferred_element_type=jnp.float32)
    m_ref[...] = m_new

    @pl.when(k_idx == pl.num_programs(2) - 1)
    def _finalize():
        # Exact normalization (one (TQ, D) divide per Q tile).
        o_ref[0] = (acc_ref[...] / l_ref[...]).astype(o_ref.dtype)


def cross_attention(query, key_value, *, block_q=512, block_k=512,
                    mxu_dtype=jnp.bfloat16, kv_resident_bytes=4 * 1024 * 1024):
    """softmax(Q @ K^T / sqrt(D), axis=-1) @ K, with K == V == key_value.

    query:     (B, Lq, D)
    key_value: (B, Lk, D)
    returns:   (B, Lq, D)

    mxu_dtype: operand dtype for the two MXU matmuls (accumulation is always
               f32). Default bf16 = standard flash-attention numerics; pass
               None to keep the input dtype (more accurate, more MXU passes).
    kv_resident_bytes: if one batch element's (padded) KV fits in this budget,
               use the single-pass kernel (whole KV resident, no online
               softmax, no k grid axis).
    """
    B, Lq, D = query.shape
    Bk, Lk, Dk = key_value.shape
    assert B == Bk and D == Dk, "batch / feature dims must match"

    compute_dtype = (jnp.dtype(query.dtype) if mxu_dtype is None
                     else jnp.dtype(mxu_dtype))

    # Sublane granularity for the second-minor block dim (8 for 4B, 16 for 2B).
    sub = 8 if jnp.dtype(query.dtype).itemsize >= 4 else 16
    tq = min(block_q, _round_up(Lq, sub))

    lk_pad_min = _round_up(Lk, sub)
    kv_bytes = lk_pad_min * D * jnp.dtype(key_value.dtype).itemsize
    single_pass = kv_bytes <= kv_resident_bytes
    tk = lk_pad_min if single_pass else min(block_k, lk_pad_min)

    lq_pad = _round_up(Lq, tq)
    lk_pad = _round_up(Lk, tk)
    if lq_pad != Lq:
        query = jnp.pad(query, ((0, 0), (0, lq_pad - Lq), (0, 0)))
    if lk_pad != Lk:
        key_value = jnp.pad(key_value, ((0, 0), (0, lk_pad - Lk), (0, 0)))

    nq = lq_pad // tq
    nk = lk_pad // tk
    scale = 1.0 / math.sqrt(float(D))
    mask_k = lk_pad != Lk

    if single_pass:
        kernel = functools.partial(
            _single_pass_kernel, scale=scale, lk_valid=Lk, mask_k=mask_k,
            compute_dtype=compute_dtype)
        out = pl.pallas_call(
            kernel,
            out_shape=jax.ShapeDtypeStruct((B, lq_pad, D), query.dtype),
            grid=(B, nq),
            in_specs=[
                pl.BlockSpec((1, tq, D), lambda b, i: (b, i, 0)),
                pl.BlockSpec((1, tk, D), lambda b, i: (b, 0, 0)),
            ],
            out_specs=pl.BlockSpec((1, tq, D), lambda b, i: (b, i, 0)),
            compiler_params=pltpu.CompilerParams(
                dimension_semantics=("parallel", "parallel"),
                vmem_limit_bytes=_VMEM_LIMIT_BYTES),
        )(query, key_value)
    else:
        kernel = functools.partial(
            _flash_kernel, scale=scale, lk_valid=Lk, block_k=tk, mask_k=mask_k,
            compute_dtype=compute_dtype)
        out = pl.pallas_call(
            kernel,
            out_shape=jax.ShapeDtypeStruct((B, lq_pad, D), query.dtype),
            grid=(B, nq, nk),
            in_specs=[
                # Query tile: same block index for every k -> resident in VMEM.
                pl.BlockSpec((1, tq, D), lambda b, i, k: (b, i, 0)),
                # Single shared K/V tile: one HBM->VMEM DMA per (b, q, k) step,
                # reused by both matmuls (K and V are the same tensor).
                pl.BlockSpec((1, tk, D), lambda b, i, k: (b, k, 0)),
            ],
            out_specs=pl.BlockSpec((1, tq, D), lambda b, i, k: (b, i, 0)),
            scratch_shapes=[
                pltpu.VMEM((tq, D), compute_dtype),   # pre-scaled Q (hoisted)
                pltpu.VMEM((tq, 1), jnp.float32),     # running max m
                pltpu.VMEM((tq, 1), jnp.float32),     # running denom l
                pltpu.VMEM((tq, D), jnp.float32),     # running accumulator
            ],
            compiler_params=pltpu.CompilerParams(
                # B and Lq-tiles are independent (megacore-shardable); the
                # Lk-tile axis carries the online-softmax reduction -> serial.
                dimension_semantics=("parallel", "parallel", "arbitrary"),
                vmem_limit_bytes=_VMEM_LIMIT_BYTES),
        )(query, key_value)

    if lq_pad != Lq:
        out = out[:, :Lq, :]
    return out


def _reference(query, key_value):
    hp = jax.lax.Precision.HIGHEST
    scores = jnp.matmul(query, jnp.swapaxes(key_value, -2, -1),
                        precision=hp) / (query.shape[-1] ** 0.5)
    attn = jax.nn.softmax(scores, axis=-1)
    return jnp.matmul(attn, key_value, precision=hp)


if __name__ == "__main__":
    key = jax.random.PRNGKey(0)
    kq, kkv, kq2, kkv2 = jax.random.split(key, 4)

    # Small shapes implied by the module forward: batch=2, seq=8, hidden=32.
    B, Lq, Lk, D = 2, 8, 8, 32
    query = jax.random.normal(kq, (B, Lq, D), dtype=jnp.float32)
    key_value = jax.random.normal(kkv, (B, Lk, D), dtype=jnp.float32)

    out = cross_attention(query, key_value)          # single-pass fast path
    jax.block_until_ready(out)
    ref = _reference(query, key_value)
    assert out.shape == (B, Lq, D)
    err1 = float(jnp.max(jnp.abs(out - ref)))
    assert jnp.allclose(out, ref, atol=2e-2, rtol=2e-2), \
        f"mismatch (single-pass), max abs err = {err1}"

    # Second check: multiple KV tiles + ragged tail to exercise the online
    # softmax accumulation and the padded-column masking path.
    B2, Lq2, Lk2, D2 = 2, 40, 40, 32
    q2 = jax.random.normal(kq2, (B2, Lq2, D2), dtype=jnp.float32)
    kv2 = jax.random.normal(kkv2, (B2, Lk2, D2), dtype=jnp.float32)
    out2 = cross_attention(q2, kv2, block_q=16, block_k=16,
                           kv_resident_bytes=0)       # force flash path
    jax.block_until_ready(out2)
    ref2 = _reference(q2, kv2)
    assert out2.shape == (B2, Lq2, D2)
    err2 = float(jnp.max(jnp.abs(out2 - ref2)))
    assert jnp.allclose(out2, ref2, atol=2e-2, rtol=2e-2), \
        f"mismatch (tiled/masked), max abs err = {err2}"

    print("KERNEL_OK")
</pallas_src>

<mosaic_0001>
module attributes {stable_mosaic.version = 11 : i64} {
  func.func @_single_pass_kernel(%arg0: i32, %arg1: i32, %arg2: memref<1x8x32xf32, #tpu.memory_space<vmem>>, %arg3: memref<1x8x32xf32, #tpu.memory_space<vmem>>, %arg4: memref<1x8x32xf32, #tpu.memory_space<vmem>>) attributes {dimension_semantics = [#tpu.dimension_semantics<parallel>, #tpu.dimension_semantics<parallel>], iteration_bounds = array<i64: 2, 1>, scalar_prefetch = 0 : i64, scratch_operands = 0 : i64, tpu.core_type = #tpu.core_type<tc>, window_params = [{transform_indices = @transform_0, window_bounds = array<i64: 1, 8, 32>}, {transform_indices = @transform_1, window_bounds = array<i64: 1, 8, 32>}, {transform_indices = @transform_2, window_bounds = array<i64: 1, 8, 32>}]} {
    %c0 = arith.constant 0 : index
    %c0_0 = arith.constant 0 : index
    %c0_1 = arith.constant 0 : index
    %0 = vector.load %arg2[%c0, %c0_0, %c0_1] : memref<1x8x32xf32, #tpu.memory_space<vmem>>, vector<1x8x32xf32>
    %1 = vector.shape_cast %0 : vector<1x8x32xf32> to vector<8x32xf32>
    %cst = arith.constant 0.176776692 : f32
    %2 = vector.broadcast %cst : f32 to vector<8x32xf32>
    %3 = arith.mulf %1, %2 : vector<8x32xf32>
    %4 = arith.truncf %3 : vector<8x32xf32> to vector<8x32xbf16>
    %c0_2 = arith.constant 0 : index
    %c0_3 = arith.constant 0 : index
    %c0_4 = arith.constant 0 : index
    %5 = vector.load %arg3[%c0_2, %c0_3, %c0_4] : memref<1x8x32xf32, #tpu.memory_space<vmem>>, vector<1x8x32xf32>
    %6 = vector.shape_cast %5 : vector<1x8x32xf32> to vector<8x32xf32>
    %7 = arith.truncf %6 : vector<8x32xf32> to vector<8x32xbf16>
    %cst_5 = arith.constant dense<0.000000e+00> : vector<8x8xf32>
    %8 = tpu.matmul %4, %7, %cst_5 {dimension_numbers = #tpu.dot_dimension_numbers<[1], [1], [0], [0], [0, 0, 1, 0], [], []>} : vector<8x32xbf16>, vector<8x32xbf16>, vector<8x8xf32> -> vector<8x8xf32>
    %cst_6 = arith.constant dense<0xFF800000> : vector<8xf32>
    %9 = vector.multi_reduction <maximumf>, %8, %cst_6 [1] : vector<8x8xf32> to vector<8xf32>
    %10 = vector.shape_cast %9 : vector<8xf32> to vector<8x1xf32>
    %11 = vector.broadcast %10 : vector<8x1xf32> to vector<8x8xf32>
    %12 = arith.subf %8, %11 : vector<8x8xf32>
    %13 = math.exp %12 : vector<8x8xf32>
    %cst_7 = arith.constant dense<0.000000e+00> : vector<8xf32>
    %14 = vector.multi_reduction <add>, %13, %cst_7 [1] : vector<8x8xf32> to vector<8xf32>
    %15 = vector.shape_cast %14 : vector<8xf32> to vector<8x1xf32>
    %16 = arith.truncf %13 : vector<8x8xf32> to vector<8x8xbf16>
    %cst_8 = arith.constant dense<0.000000e+00> : vector<8x32xf32>
    %17 = tpu.matmul %16, %7, %cst_8 {dimension_numbers = #tpu.dot_dimension_numbers<[1], [0], [0], [1], [0, 0, 1, 1], [], []>} : vector<8x8xbf16>, vector<8x32xbf16>, vector<8x32xf32> -> vector<8x32xf32>
    %18 = vector.broadcast %15 : vector<8x1xf32> to vector<8x32xf32>
    %19 = arith.divf %17, %18 : vector<8x32xf32>
    %c0_9 = arith.constant 0 : index
    %c0_10 = arith.constant 0 : index
    %c0_11 = arith.constant 0 : index
    %20 = vector.load %arg4[%c0_9, %c0_10, %c0_11] : memref<1x8x32xf32, #tpu.memory_space<vmem>>, vector<1x8x32xf32>
    %21 = vector.shape_cast %20 : vector<1x8x32xf32> to vector<8x32xf32>
    %22 = vector.shape_cast %19 : vector<8x32xf32> to vector<1x8x32xf32>
    tpu.vector_store %arg4[%c0_9, %c0_10, %c0_11], %22 {strides = array<i32>} : memref<1x8x32xf32, #tpu.memory_space<vmem>>, vector<1x8x32xf32>,
    return
  }
  func.func @transform_0(%arg0: i32, %arg1: i32) -> (i32, i32, i32) {
    %c0_i32 = arith.constant 0 : i32
    %c0_i32_0 = arith.constant 0 : i32
    return %arg0, %arg1, %c0_i32 : i32, i32, i32
  }
  func.func @transform_1(%arg0: i32, %arg1: i32) -> (i32, i32, i32) {
    %c0_i32 = arith.constant 0 : i32
    %c0_i32_0 = arith.constant 0 : i32
    %c0_i32_1 = arith.constant 0 : i32
    return %arg0, %c0_i32, %c0_i32_0 : i32, i32, i32
  }
  func.func @transform_2(%arg0: i32, %arg1: i32) -> (i32, i32, i32) {
    %c0_i32 = arith.constant 0 : i32
    %c0_i32_0 = arith.constant 0 : i32
    return %arg0, %arg1, %c0_i32 : i32, i32, i32
  }
}

</mosaic_0001>

<llo_original>
// kernel: tpu_custom_call.1
$region0: #{tpu_custom_call.1}
  #allocation0 [shape = 'u32[]', space=smem, size = 0x4, offset = 0x4, fixed_abs, tag = 'smem constant byte address 0x4 - core index']
  #allocation1 [shape = 'u32[144,128]{1,0:T(1,128)}', space=vmem, size = 0x12000, scoped, tag = 'internal scratch']
  %s0 = inlined_call_operand.hbm [shape: f32[2,8,32], index: 0, kind: input, shape index: {}]
  %s1 = inlined_call_operand.hbm [shape: f32[2,8,32], index: 1, kind: input, shape index: {}]
  %s2 = inlined_call_operand.hbm [shape: f32[2,8,32], index: 2, kind: output, shape index: {}]
  %s3 = sld [smem:[#allocation0]]
  $region49: #{tpu_custom_call.1} parent=0
    _
  %s5 = ssub.s32 1, %s3
  %s6 = scalar_select 0, %s5, %s3
  $region1: #{tpu_custom_call.1} parent=0
    #allocation2 [shape = 'u8[8192]{0}', space=vmem, size = 0x2000, scoped, tag = 'input window, operand 0']
    #allocation3 [shape = 's32[2]{0}', space=sflag, size = 0x8, scoped, tag = 'scoped memory for tpu_custom_call.1']
    #allocation4 [shape = 's32[2]{0}', space=sflag, size = 0x8, scoped, tag = 'scoped memory for tpu_custom_call.1']
    #allocation5 [shape = 'u8[8192]{0}', space=vmem, size = 0x2000, scoped, tag = 'input window, operand 1']
    #allocation6 [shape = 's32[2]{0}', space=sflag, size = 0x8, scoped, tag = 'scoped memory for tpu_custom_call.1']
    #allocation7 [shape = 'u8[8192]{0}', space=vmem, size = 0x2000, scoped, tag = 'output window, operand 0']
    %7 = vsyncpa [#allocation3], 0
    %s8 = scalar_lea.sflag [#allocation3], 1
    %9 = vsyncpa %s8, 0
    %10 = vsyncpa [#allocation6], 0
    %s11 = scalar_lea.sflag [#allocation6], 1
    %12 = vsyncpa %s11, 0
    %13 = vsyncpa [#allocation4], 0
    %s14 = scalar_lea.sflag [#allocation4], 1
    %15 = vsyncpa %s14, 0
    loop: start=0, step=1, limit=4
    $region2: #{tpu_custom_call.1} parent=1 // loop_pre_header
      _
    $region3: #{tpu_custom_call.1} parent=1 // loop_header
      %s17 = sphi 0, %s21
      %p18 = scmp.ge.s32.totalorder %s17, 4
      %s24 = sphi 0, %s36
      %s25 = sphi 0, %s32
      %s26 = sphi 0, %s24
      %s27 = sphi 0, %s25
      %s28 = sphi 0, %s26
      %s29 = sphi 0, %s27
      %s41 = sphi 0, %s43
      %s44 = sphi 0, %s41
      %s45 = sphi 0, %s44
      %s61 = sphi 0, %s45
      %s67 = sphi 0, %s69
      %s70 = sphi 0, %s67
      %s71 = sphi 0, %s70
      %s87 = sphi 0, %s71
      %s95 = sphi 0, %s97
      %s98 = sphi 0, %s95
      %s99 = sphi 0, %s98
      %s115 = sphi 0, %s99
    $region4: #{tpu_custom_call.1} parent=1 // loop_header_branch
      %20 = sbr.rel (%p18) target = $region8
    $region5: #{tpu_custom_call.1} parent=1 // loop_body
      %s22 = ssub.s32 %s17, 1
      %s23 = ssub.s32 %s17, 2
      %s30 = sadd.s32 1, %s25
      %p31 = scmp.ge.s32.totalorder %s30, 1
      %s32 = scalar_select %p31, 0, %s30
      %s33 = sadd.s32 1, %s24
      %s34 = scalar_select %p31, %s33, %s24
      %p35 = scmp.ge.s32.totalorder %s34, 2
      %s36 = scalar_select %p35, 0, %s34
      %s37 = ssub.s32 %s24, %s36
      %s38 = ssub.s32 %s25, %s32
      %s39 = sor.u32 %s37, %s38
      %p40 = scmp.eq.s32.totalorder %s39, 0
      %s42 = sadd.s32 %s41, 1
      %s43 = scalar_select %p40, %s41, %s42
      %p46 = pneg %p40
      %p47 = scmp.eq.s32.totalorder %s17, 1
      %p48 = por %p46, %p47
      %p49 = scmp.ne.s32.totalorder %s41, %s44
      %p50 = scmp.eq.s32.totalorder %s17, 0
      %p51 = por %p49, %p50
      %p52 = scmp.ne.s32.totalorder %s41, %s44
      %p53 = scmp.eq.s32.totalorder %s22, 1
      %p54 = por %p52, %p53
      %p55 = scmp.ne.s32.totalorder %s44, %s45
      %p56 = scmp.eq.s32.totalorder %s22, 0
      %p57 = por %p55, %p56
      %p58 = scmp.ne.s32.totalorder %s44, %s45
      %p59 = scmp.eq.s32.totalorder %s23, 1
      %p60 = por %p58, %p59
      %p62 = scmp.ne.s32.totalorder %s45, %s61
      %p63 = scmp.eq.s32.totalorder %s23, 0
      %p64 = por %p62, %p63
      %s65 = ssub.s32 %s24, %s36
      %p66 = scmp.eq.s32.totalorder %s65, 0
      %s68 = sadd.s32 %s67, 1
      %s69 = scalar_select %p66, %s67, %s68
      %p72 = pneg %p66
      %p73 = scmp.eq.s32.totalorder %s17, 1
      %p74 = por %p72, %p73
      %p75 = scmp.ne.s32.totalorder %s67, %s70
      %p76 = scmp.eq.s32.totalorder %s17, 0
      %p77 = por %p75, %p76
      %p78 = scmp.ne.s32.totalorder %s67, %s70
      %p79 = scmp.eq.s32.totalorder %s22, 1
      %p80 = por %p78, %p79
      %p81 = scmp.ne.s32.totalorder %s70, %s71
      %p82 = scmp.eq.s32.totalorder %s22, 0
      %p83 = por %p81, %p82
      %p84 = scmp.ne.s32.totalorder %s70, %s71
      %p85 = scmp.eq.s32.totalorder %s23, 1
      %p86 = por %p84, %p85
      %p88 = scmp.ne.s32.totalorder %s71, %s87
      %p89 = scmp.eq.s32.totalorder %s23, 0
      %p90 = por %p88, %p89
      %s91 = ssub.s32 %s24, %s36
      %s92 = ssub.s32 %s25, %s32
      %s93 = sor.u32 %s91, %s92
      %p94 = scmp.eq.s32.totalorder %s93, 0
      %s96 = sadd.s32 %s95, 1
      %s97 = scalar_select %p94, %s95, %s96
      %p100 = pneg %p94
      %p101 = scmp.eq.s32.totalorder %s17, 1
      %p102 = por %p100, %p101
      %p103 = scmp.ne.s32.totalorder %s95, %s98
      %p104 = scmp.eq.s32.totalorder %s17, 0
      %p105 = por %p103, %p104
      %p106 = scmp.ne.s32.totalorder %s95, %s98
      %p107 = scmp.eq.s32.totalorder %s22, 1
      %p108 = por %p106, %p107
      %p109 = scmp.ne.s32.totalorder %s98, %s99
      %p110 = scmp.eq.s32.totalorder %s22, 0
      %p111 = por %p109, %p110
      %p112 = scmp.ne.s32.totalorder %s98, %s99
      %p113 = scmp.eq.s32.totalorder %s23, 1
      %p114 = por %p112, %p113
      %p116 = scmp.ne.s32.totalorder %s99, %s115
      %p117 = scmp.eq.s32.totalorder %s23, 0
      %p118 = por %p116, %p117
      %p119 = scmp.le.s32.totalorder 1, %s17
      %p120 = scmp.lt.s32.totalorder %s17, 3
      %p121 = pnand %p119, %p120
      %p122 = pneg %p121
      // Predicated region
      $region9: #{tpu_custom_call.1} parent=5 // pred_check
        _
      $region10: #{tpu_custom_call.1} parent=5 // pred_check_branch
        %124 = sbr.rel (%p121) target = $region12
      $region11: #{tpu_custom_call.1} parent=5 // pred_region
        %s125 = ssub.s32 %s17, 1
      $region12: #{tpu_custom_call.1} parent=5 // pred_fallthru
        _
      %p126 = scmp.lt.s32.totalorder %s17, 2
      // Predicated region
      $region13: #{tpu_custom_call.1} parent=5 // pred_check
        %p127 = pneg %p126
      $region14: #{tpu_custom_call.1} parent=5 // pred_check_branch
        %129 = sbr.rel (%p127) target = $region16
      $region15: #{tpu_custom_call.1} parent=5 // pred_region
        // Predicated region
        $region17: #{tpu_custom_call.1} parent=15 // pred_check
          %p130 = pneg %p51
        $region18: #{tpu_custom_call.1} parent=15 // pred_check_branch
          %132 = sbr.rel (%p130) target = $region20
        $region19: #{tpu_custom_call.1} parent=15 // pred_region
          %s133 = sand.u32 %s41, 1
          %s134 = scalar_lea.sflag [#allocation3], %s133
          %s135 = sand.u32 %s41, 1
          %s136 = smul.addr %s135, 8
          %s137 = scalar_lea.vmem [#allocation2], %s136
          %s139 = ssub.s32 128, 128
          %140 = vsyncadd %s134, %s139
          %s141 = sadd.s32 %s25, %s24
          %s142 = smul.addr %s141, 128
          %s143 = scalar_lea.hbm %s0, %s142
          %s145 = sshll.u32 %s137, 4
          %s146 = int_to_ptr.vmem [resolvable:$true] %s145
          %148 = dma.hbm_to_vmem [thread:$0]  %s143, 128, %s146, %s134
        $region20: #{tpu_custom_call.1} parent=15 // pred_fallthru
          _
        // Predicated region
        $region21: #{tpu_custom_call.1} parent=15 // pred_check
          %p149 = pneg %p77
        $region22: #{tpu_custom_call.1} parent=15 // pred_check_branch
          %151 = sbr.rel (%p149) target = $region24
        $region23: #{tpu_custom_call.1} parent=15 // pred_region
          %s152 = sand.u32 %s67, 1
          %s153 = scalar_lea.sflag [#allocation6], %s152
          %s154 = sand.u32 %s67, 1
          %s155 = smul.addr %s154, 8
          %s156 = scalar_lea.vmem [#allocation5], %s155
          %s158 = ssub.s32 128, 128
          %159 = vsyncadd %s153, %s158
          %s160 = smul.addr %s24, 128
          %s161 = scalar_lea.hbm %s1, %s160
          %s163 = sshll.u32 %s156, 4
          %s164 = int_to_ptr.vmem [resolvable:$true] %s163
          %166 = dma.hbm_to_vmem [thread:$0]  %s161, 128, %s164, %s153
        $region24: #{tpu_custom_call.1} parent=15 // pred_fallthru
          _
      $region16: #{tpu_custom_call.1} parent=5 // pred_fallthru
        _
      %p167 = scmp.le.s32.totalorder 1, %s17
      %p168 = scmp.lt.s32.totalorder %s17, 3
      %p169 = pnand %p167, %p168
      %p170 = pneg %p169
      // Predicated region
      $region25: #{tpu_custom_call.1} parent=5 // pred_check
        _
      $region26: #{tpu_custom_call.1} parent=5 // pred_check_branch
        %172 = sbr.rel (%p169) target = $region28
      $region27: #{tpu_custom_call.1} parent=5 // pred_region
        %s173 = ssub.s32 %s17, 1
        %s174 = sand.u32 %s44, 1
        %s175 = scalar_lea.sflag [#allocation3], %s174
        %s176 = sand.u32 %s44, 1
        %s177 = smul.addr %s176, 8
        %s178 = scalar_lea.vmem [#allocation2], %s177
        // Predicated region
        $region29: #{tpu_custom_call.1} parent=27 // pred_check
          %p179 = pneg %p57
        $region30: #{tpu_custom_call.1} parent=27 // pred_check_branch
          %181 = sbr.rel (%p179) target = $region32
        $region31: #{tpu_custom_call.1} parent=27 // pred_region
          %182 = dma.done %s175, 128
        $region32: #{tpu_custom_call.1} parent=27 // pred_fallthru
          _
        %s183 = sand.u32 %s70, 1
        %s184 = scalar_lea.sflag [#allocation6], %s183
        %s185 = sand.u32 %s70, 1
        %s186 = smul.addr %s185, 8
        %s187 = scalar_lea.vmem [#allocation5], %s186
        // Predicated region
        $region33: #{tpu_custom_call.1} parent=27 // pred_check
          %p188 = pneg %p83
        $region34: #{tpu_custom_call.1} parent=27 // pred_check_branch
          %190 = sbr.rel (%p188) target = $region36
        $region35: #{tpu_custom_call.1} parent=27 // pred_region
          %191 = dma.done %s184, 128
        $region36: #{tpu_custom_call.1} parent=27 // pred_fallthru
          _
        %s192 = sand.u32 %s44, 1
        %s193 = scalar_lea.sflag [#allocation3], %s192
        %s194 = sand.u32 %s44, 1
        %s195 = smul.addr %s194, 8
        %s196 = scalar_lea.vmem [#allocation2], %s195
        %p197 = pneg %p57
        %p198 = pneg %p54
        %s199 = sand.u32 %s70, 1
        %s200 = scalar_lea.sflag [#allocation6], %s199
        %s201 = sand.u32 %s70, 1
        %s202 = smul.addr %s201, 8
        %s203 = scalar_lea.vmem [#allocation5], %s202
        %p204 = pneg %p83
        %p205 = pneg %p80
        %p206 = pneg %p111
        %p207 = pneg %p108
        %s208 = sand.u32 %s98, 1
        %s209 = scalar_lea.sflag [#allocation4], %s208
        %s210 = sand.u32 %s98, 1
        %s211 = smul.addr %s210, 8
        %s212 = scalar_lea.vmem [#allocation7], %s211
        %v214 = vld [vmem:[%s178] sm:$0xff]
        %v215 = vmul.f32 %v214, 0.17677669
        %v216 = vpack.c.bf16 %v215, %v215
        %v217 = vld [vmem:[%s187] sm:$0xff]
        %v218 = vpack.c.bf16 %v217, %v217
        %vm219 = vcmask 261120
        %v221 = vsel %vm219, %v216, 0
        %v224 = vsel %vm219, %v218, 0
        %226 = vmatprep.subr.bf16.mxu0 0
        %227 = vmatpush1.bf16.xpose.msra.mxu0 %v224
        %228 = vmatprep.subr.bf16.mxu0 0
        %229 = vmatpush1.bf16.xpose.msra.mxu0 0
        %230 = vmatprep.subr.bf16.mxu0 0
        %231 = vmatpush1.bf16.xpose.msra.mxu0 0
        %232 = vmatprep.subr.bf16.mxu0 0
        %233 = vmatpush1.bf16.xpose.msra.mxu0 0
        %234 = vmatprep.subr.bf16.mxu0 0
        %235 = vmatpush1.bf16.xpose.msra.mxu0 0
        %236 = vmatprep.subr.bf16.mxu0 0
        %237 = vmatpush1.bf16.xpose.msra.mxu0 0
        %238 = vmatprep.subr.bf16.mxu0 0
        %239 = vmatpush1.bf16.xpose.msra.mxu0 0
        %240 = vmatprep.subr.bf16.mxu0 0
        %241 = vmatpush1.bf16.xpose.msra.mxu0 0
        %242 = vmatprep.subr.bf16.mxu0 0
        %243 = vmatpush1.bf16.xpose.msra.mxu0 0
        %244 = vmatprep.subr.bf16.mxu0 0
        %245 = vmatpush1.bf16.xpose.msra.mxu0 0
        %246 = vmatprep.subr.bf16.mxu0 0
        %247 = vmatpush1.bf16.xpose.msra.mxu0 0
        %248 = vmatprep.subr.bf16.mxu0 0
        %249 = vmatpush1.bf16.xpose.msra.mxu0 0
        %250 = vmatprep.subr.bf16.mxu0 0
        %251 = vmatpush1.bf16.xpose.msra.mxu0 0
        %252 = vmatprep.subr.bf16.mxu0 0
        %253 = vmatpush1.bf16.xpose.msra.mxu0 0
        %254 = vmatprep.subr.bf16.mxu0 0
        %255 = vmatpush1.bf16.xpose.msra.mxu0 0
        %256 = vmatprep.subr.bf16.mxu0 0
        %257 = vmatpush1.bf16.xpose.msra.mxu0 0
        %258 = vmatprep.mubr.bf16.mxu0 0
        %259 = vmatmul.mubr.bf16.gmra.mrb[0].mxu0 %v221
        %v260 = vpop.f32.mrb[0].mxu0
        %v261 = vadd.f32 0.0, %v260
        %v262 = vpop.f32.mrb[0].mxu0
        %v263 = vpop.f32.mrb[0].mxu0
        %v264 = vpop.f32.mrb[0].mxu0
        %265 = vdwg.mxu0
        %vm266 = vcmask 64512
        %v267 = vsel %vm266, %v261, -inf
        %268 = vmax.xlane.f32.xlu0 %v267
        %v269 = vpop.xlane.xlu0 %268
        %v270 = vsub.f32 %v261, %v269
        %v271 = vmul.f32 %v270, 1.442695
        %v272 = vpow.pop %v271
        %v273 = vsel %vm266, %v272, 0.0
        %274 = vadd.xlane.f32.xlu0 %v273
        %v275 = vpop.xlane.xlu0 %274
        %v276 = vpack.c.bf16 %v272, %v272
        %v278 = vsel %vm266, %v276, 0
        %vm280 = vcmask 1043456
        %v281 = vsel %vm280, %v218, 0
        %283 = vmatprep.subr.bf16.mxu0 0
        %284 = vmatpush1.bf16.msra.mxu0 %v281
        %285 = vmatprep.subr.bf16.mxu0 0
        %286 = vmatpush1.bf16.msra.mxu0 0
        %287 = vmatprep.subr.bf16.mxu0 0
        %288 = vmatpush1.bf16.msra.mxu0 0
        %289 = vmatprep.subr.bf16.mxu0 0
        %290 = vmatpush1.bf16.msra.mxu0 0
        %291 = vmatprep.subr.bf16.mxu0 0
        %292 = vmatpush1.bf16.msra.mxu0 0
        %293 = vmatprep.subr.bf16.mxu0 0
        %294 = vmatpush1.bf16.msra.mxu0 0
        %295 = vmatprep.subr.bf16.mxu0 0
        %296 = vmatpush1.bf16.msra.mxu0 0
        %297 = vmatprep.subr.bf16.mxu0 0
        %298 = vmatpush1.bf16.msra.mxu0 0
        %299 = vmatprep.subr.bf16.mxu0 0
        %300 = vmatpush1.bf16.msra.mxu0 0
        %301 = vmatprep.subr.bf16.mxu0 0
        %302 = vmatpush1.bf16.msra.mxu0 0
        %303 = vmatprep.subr.bf16.mxu0 0
        %304 = vmatpush1.bf16.msra.mxu0 0
        %305 = vmatprep.subr.bf16.mxu0 0
        %306 = vmatpush1.bf16.msra.mxu0 0
        %307 = vmatprep.subr.bf16.mxu0 0
        %308 = vmatpush1.bf16.msra.mxu0 0
        %309 = vmatprep.subr.bf16.mxu0 0
        %310 = vmatpush1.bf16.msra.mxu0 0
        %311 = vmatprep.subr.bf16.mxu0 0
        %312 = vmatpush1.bf16.msra.mxu0 0
        %313 = vmatprep.subr.bf16.mxu0 0
        %314 = vmatpush1.bf16.msra.mxu0 0
        %315 = vmatprep.mubr.bf16.mxu0 0
        %316 = vmatmul.mubr.bf16.gmra.mrb[0].mxu0 %v278
        %v317 = vpop.f32.mrb[0].mxu0
        %v318 = vadd.f32 0.0, %v317
        %v319 = vpop.f32.mrb[0].mxu0
        %v320 = vpop.f32.mrb[0].mxu0
        %v321 = vpop.f32.mrb[0].mxu0
        %322 = vdwg.mxu0
        %v323 = vrcp.pop %v275
        %v324 = vmul.f32 %v318, %v323
        %325 = vst.msk [vmem:[%s212] sm:$0xff] %vm219, %v324
        %s326 = sand.u32 %s98, 1
        %s327 = scalar_lea.sflag [#allocation4], %s326
        %s328 = sand.u32 %s98, 1
        %s329 = smul.addr %s328, 8
        %s330 = scalar_lea.vmem [#allocation7], %s329
        // Predicated region
        $region37: #{tpu_custom_call.1} parent=27 // pred_check
          %p331 = pneg %p108
        $region38: #{tpu_custom_call.1} parent=27 // pred_check_branch
          %333 = sbr.rel (%p331) target = $region40
        $region39: #{tpu_custom_call.1} parent=27 // pred_region
          %s335 = ssub.s32 128, 128
          %336 = vsyncadd %s327, %s335
          %s337 = sadd.s32 %s27, %s26
          %s338 = smul.addr %s337, 128
          %s339 = scalar_lea.hbm %s2, %s338
          %s341 = sshll.u32 %s330, 4
          %s342 = int_to_ptr.vmem [resolvable:$true] %s341
          %344 = dma.vmem_to_hbm [thread:$0]  %s342, 128, %s339, %s327
        $region40: #{tpu_custom_call.1} parent=27 // pred_fallthru
          _
      $region28: #{tpu_custom_call.1} parent=5 // pred_fallthru
        _
      %p345 = scmp.le.s32.totalorder 2, %s17
      // Predicated region
      $region41: #{tpu_custom_call.1} parent=5 // pred_check
        %p346 = pneg %p345
      $region42: #{tpu_custom_call.1} parent=5 // pred_check_branch
        %348 = sbr.rel (%p346) target = $region44
      $region43: #{tpu_custom_call.1} parent=5 // pred_region
        %s349 = ssub.s32 %s17, 2
        // Predicated region
        $region45: #{tpu_custom_call.1} parent=43 // pred_check
          %p350 = pneg %p114
        $region46: #{tpu_custom_call.1} parent=43 // pred_check_branch
          %352 = sbr.rel (%p350) target = $region48
        $region47: #{tpu_custom_call.1} parent=43 // pred_region
          %s353 = sand.u32 %s99, 1
          %s354 = scalar_lea.sflag [#allocation4], %s353
          %s355 = sand.u32 %s99, 1
          %s356 = smul.addr %s355, 8
          %s357 = scalar_lea.vmem [#allocation7], %s356
          %358 = dma.done %s354, 128
        $region48: #{tpu_custom_call.1} parent=43 // pred_fallthru
          _
      $region44: #{tpu_custom_call.1} parent=5 // pred_fallthru
        _
    $region6: #{tpu_custom_call.1} parent=1 // loop_footer
      %s21 = sadd.s32 1, %s17
    $region7: #{tpu_custom_call.1} parent=1 // loop_footer_branch
      %16 = sbr.rel target = $region3
    $region8: #{tpu_custom_call.1} parent=1 // loop_exit
      _
    %359 = vsyncpa [#allocation3], 1
    %s360 = scalar_lea.sflag [#allocation3], 1
    %361 = vsyncpa %s360, 1
    %362 = vsyncpa [#allocation6], 1
    %s363 = scalar_lea.sflag [#allocation6], 1
    %364 = vsyncpa %s363, 1
    %365 = vsyncpa [#allocation4], 1
    %s366 = scalar_lea.sflag [#allocation4], 1
    %367 = vsyncpa %s366, 1

</llo_original>
